<compile_context>
chip_gen: v5e
topology: v5e:2x2
jax: 0.10.0
libtpu: 0.0.40
codegen_flags: <defaults>
</compile_context>

<pallas_src>
import jax
import jax.numpy as jnp
from jax.experimental import pallas as pl
from jax.experimental.pallas import tpu as pltpu

SUBLANE = 8
OUT_W = 32  # packed output slab width: cols [0:combined_hidden]=h, next num_classes=logits


def _round_up(x, m):
    return (x + m - 1) // m * m


def teacher_kernel(ehr_ref, gene_ref,
                   w1_ref, b1_ref,
                   w2e_ref, w2g_ref, b2_ref,
                   m_ref, bo_ref,
                   out_ref):
    # gene branch: Linear(gene_dim -> gene_hidden) + ReLU (Dropout = identity at eval)
    h_gene = jnp.dot(gene_ref[...], w1_ref[...],
                     preferred_element_type=jnp.float32) + b1_ref[...]
    h_gene = jnp.maximum(h_gene, 0.0)

    # combine branch: concat([ehr, h_gene]) @ W2 + b2 == ehr@W2e + h_gene@W2g + b2
    z2 = (jnp.dot(ehr_ref[...], w2e_ref[...], preferred_element_type=jnp.float32)
          + jnp.dot(h_gene, w2g_ref[...], preferred_element_type=jnp.float32)
          + b2_ref[...])
    h = jnp.maximum(z2, 0.0)                               # (TB, combined_hidden)

    # packed output: h @ [I | W3 | 0] + [0 | b3 | 0]
    #   -> cols 0:combined_hidden = h (identity pass-through, exact),
    #      next num_classes cols  = logits
    out = jnp.dot(h, m_ref[...], preferred_element_type=jnp.float32) + bo_ref[...]
    out_ref[...] = out.astype(out_ref.dtype)

    # TODO(synk): training-mode Dropout(p=0.2) not implemented (inference semantics).


def prepare_params(params):
    """One-time construction of kernel-ready weights (hoisted out of the per-call path)."""
    f32 = jnp.float32
    w1 = params["w1"].astype(f32)          # (gene_dim, gene_hidden)
    b1 = params["b1"].astype(f32)
    w2 = params["w2"].astype(f32)          # (ehr_dim + gene_hidden, combined_hidden)
    b2 = params["b2"].astype(f32)
    w3 = params["w3"].astype(f32)          # (combined_hidden, num_classes)
    b3 = params["b3"].astype(f32)

    gene_hidden = w1.shape[1]
    ehr_dim = w2.shape[0] - gene_hidden
    combined_hidden = w2.shape[1]
    num_classes = w3.shape[1]
    assert combined_hidden + num_classes <= OUT_W

    w2e = w2[:ehr_dim, :]                  # (ehr_dim, combined_hidden)
    w2g = w2[ehr_dim:, :]                  # (gene_hidden, combined_hidden)

    # packed output weight: [ I_{ch} | W3 | 0 ]  and bias [ 0 | b3 | 0 ]
    m = jnp.zeros((combined_hidden, OUT_W), f32)
    m = m.at[:, :combined_hidden].set(jnp.eye(combined_hidden, dtype=f32))
    m = m.at[:, combined_hidden:combined_hidden + num_classes].set(w3)
    bo = jnp.zeros((1, OUT_W), f32)
    bo = bo.at[0, combined_hidden:combined_hidden + num_classes].set(b3)

    return dict(w1=w1, b1=b1.reshape(1, gene_hidden),
                w2e=w2e, w2g=w2g, b2=b2.reshape(1, combined_hidden),
                m=m, bo=bo,
                ehr_dim=ehr_dim,
                combined_hidden=combined_hidden,
                num_classes=num_classes)


def teacher_forward(ehr, gene, kp, *, tb=4096):
    """ehr: (B, ehr_dim), gene: (B, gene_dim), kp: prepare_params(params)
       -> (logits (B, num_classes), h (B, combined_hidden))"""
    f32 = jnp.float32
    ehr = ehr.astype(f32)
    gene = gene.astype(f32)

    B, ehr_dim = ehr.shape
    gene_dim = gene.shape[1]
    gene_hidden = kp["w1"].shape[1]
    ch = kp["combined_hidden"]
    nc = kp["num_classes"]

    # batch tile: multiple of 8, per-generation sweet spot ~4096 (see header notes)
    TB = min(tb, _round_up(B, SUBLANE))
    grid = (pl.cdiv(B, TB),)               # ragged last block is fine (rows independent)

    def batch_spec(n):
        return pl.BlockSpec((TB, n), lambda i: (i, 0))

    def const_spec(shape):
        return pl.BlockSpec(shape, lambda i: (0,) * len(shape))

    flops = 2 * B * (gene_dim * gene_hidden
                     + ehr_dim * ch
                     + gene_hidden * ch
                     + ch * OUT_W)
    bytes_accessed = 4 * (B * (gene_dim + ehr_dim + OUT_W)
                          + gene_dim * gene_hidden + gene_hidden
                          + (ehr_dim + gene_hidden) * ch + ch
                          + ch * OUT_W + OUT_W)

    out = pl.pallas_call(
        teacher_kernel,
        out_shape=jax.ShapeDtypeStruct((B, OUT_W), f32),
        grid=grid,
        in_specs=[
            batch_spec(ehr_dim),                 # ehr  (tiled over batch, unpadded)
            batch_spec(gene_dim),                # gene (tiled over batch, unpadded 300)
            const_spec(kp["w1"].shape),          # W1  (resident)
            const_spec(kp["b1"].shape),          # b1
            const_spec(kp["w2e"].shape),         # W2e
            const_spec(kp["w2g"].shape),         # W2g
            const_spec(kp["b2"].shape),          # b2
            const_spec(kp["m"].shape),           # packed [I | W3]
            const_spec(kp["bo"].shape),          # packed [0 | b3]
        ],
        out_specs=batch_spec(OUT_W),
        compiler_params=pltpu.CompilerParams(
            dimension_semantics=("parallel",),
            vmem_limit_bytes=48 * 1024 * 1024),
        cost_estimate=pl.CostEstimate(flops=flops, transcendentals=0,
                                      bytes_accessed=bytes_accessed),
    )(ehr, gene, kp["w1"], kp["b1"], kp["w2e"], kp["w2g"], kp["b2"],
      kp["m"], kp["bo"])

    h = out[:, :ch]
    logits = out[:, ch:ch + nc]
    return logits, h


def init_params(key, ehr_dim=16, gene_dim=300, gene_hidden=16,
                combined_hidden=16, num_classes=2):
    """Deterministic PyTorch-Linear-style uniform init; weights stored as (in, out)."""
    ks = jax.random.split(key, 6)

    def linear(kw, kb, fan_in, fan_out):
        bound = 1.0 / jnp.sqrt(jnp.float32(fan_in))
        w = jax.random.uniform(kw, (fan_in, fan_out), jnp.float32, -bound, bound)
        b = jax.random.uniform(kb, (fan_out,), jnp.float32, -bound, bound)
        return w, b

    w1, b1 = linear(ks[0], ks[1], gene_dim, gene_hidden)
    w2, b2 = linear(ks[2], ks[3], ehr_dim + gene_hidden, combined_hidden)
    w3, b3 = linear(ks[4], ks[5], combined_hidden, num_classes)
    return dict(w1=w1, b1=b1, w2=w2, b2=b2, w3=w3, b3=b3)


def reference_forward(ehr, gene, params):
    h_gene = jnp.maximum(gene @ params["w1"] + params["b1"], 0.0)
    h_in = jnp.concatenate([ehr, h_gene], axis=1)
    h = jnp.maximum(h_in @ params["w2"] + params["b2"], 0.0)
    logits = h @ params["w3"] + params["b3"]
    return logits, h


if __name__ == "__main__":
    key = jax.random.PRNGKey(0)
    k_ehr, k_gene, k_params = jax.random.split(key, 3)

    B, ehr_dim, gene_dim = 2, 16, 300
    ehr = jax.random.normal(k_ehr, (B, ehr_dim), jnp.float32)
    gene = jax.random.normal(k_gene, (B, gene_dim), jnp.float32)
    params = init_params(k_params, ehr_dim=ehr_dim, gene_dim=gene_dim)

    # kernel-ready weights built once (hoisted out of the per-call path)
    kernel_params = prepare_params(params)

    logits, h = teacher_forward(ehr, gene, kernel_params)
    jax.block_until_ready((logits, h))

    ref_logits, ref_h = reference_forward(ehr, gene, params)
    assert logits.shape == (B, 2) and h.shape == (B, 16)
    assert jnp.allclose(logits, ref_logits, atol=1e-4, rtol=1e-4)
    assert jnp.allclose(h, ref_h, atol=1e-4, rtol=1e-4)

    print("KERNEL_OK")
</pallas_src>

<mosaic_0001>
module attributes {stable_mosaic.version = 11 : i64} {
  func.func @teacher_kernel(%arg0: i32, %arg1: memref<8x16xf32, #tpu.memory_space<vmem>>, %arg2: memref<8x300xf32, #tpu.memory_space<vmem>>, %arg3: memref<300x16xf32, #tpu.memory_space<vmem>>, %arg4: memref<1x16xf32, #tpu.memory_space<vmem>>, %arg5: memref<16x16xf32, #tpu.memory_space<vmem>>, %arg6: memref<16x16xf32, #tpu.memory_space<vmem>>, %arg7: memref<1x16xf32, #tpu.memory_space<vmem>>, %arg8: memref<16x32xf32, #tpu.memory_space<vmem>>, %arg9: memref<1x32xf32, #tpu.memory_space<vmem>>, %arg10: memref<8x32xf32, #tpu.memory_space<vmem>>) attributes {dimension_semantics = [#tpu.dimension_semantics<parallel>], iteration_bounds = array<i64: 1>, scalar_prefetch = 0 : i64, scratch_operands = 0 : i64, tpu.core_type = #tpu.core_type<tc>, window_params = [{transform_indices = @transform_0, window_bounds = array<i64: 8, 16>}, {transform_indices = @transform_1, window_bounds = array<i64: 8, 300>}, {pipeline_mode = #tpu.pipeline_mode<synchronous>, transform_indices = @transform_2, window_bounds = array<i64: 300, 16>}, {pipeline_mode = #tpu.pipeline_mode<synchronous>, transform_indices = @transform_3, window_bounds = array<i64: 1, 16>}, {pipeline_mode = #tpu.pipeline_mode<synchronous>, transform_indices = @transform_4, window_bounds = array<i64: 16, 16>}, {pipeline_mode = #tpu.pipeline_mode<synchronous>, transform_indices = @transform_5, window_bounds = array<i64: 16, 16>}, {pipeline_mode = #tpu.pipeline_mode<synchronous>, transform_indices = @transform_6, window_bounds = array<i64: 1, 16>}, {pipeline_mode = #tpu.pipeline_mode<synchronous>, transform_indices = @transform_7, window_bounds = array<i64: 16, 32>}, {pipeline_mode = #tpu.pipeline_mode<synchronous>, transform_indices = @transform_8, window_bounds = array<i64: 1, 32>}, {transform_indices = @transform_9, window_bounds = array<i64: 8, 32>}]} {
    %c0 = arith.constant 0 : index
    %c0_0 = arith.constant 0 : index
    %0 = vector.load %arg2[%c0, %c0_0] : memref<8x300xf32, #tpu.memory_space<vmem>>, vector<8x300xf32>
    %c0_1 = arith.constant 0 : index
    %c0_2 = arith.constant 0 : index
    %1 = vector.load %arg3[%c0_1, %c0_2] : memref<300x16xf32, #tpu.memory_space<vmem>>, vector<300x16xf32>
    %cst = arith.constant dense<0.000000e+00> : vector<8x16xf32>
    %2 = tpu.matmul %0, %1, %cst {dimension_numbers = #tpu.dot_dimension_numbers<[1], [0], [0], [1], [0, 0, 1, 1], [], []>} : vector<8x300xf32>, vector<300x16xf32>, vector<8x16xf32> -> vector<8x16xf32>
    %c0_3 = arith.constant 0 : index
    %c0_4 = arith.constant 0 : index
    %3 = vector.load %arg4[%c0_3, %c0_4] : memref<1x16xf32, #tpu.memory_space<vmem>>, vector<1x16xf32>
    %4 = vector.broadcast %3 : vector<1x16xf32> to vector<8x16xf32>
    %5 = arith.addf %2, %4 : vector<8x16xf32>
    %cst_5 = arith.constant 0.000000e+00 : f32
    %6 = vector.broadcast %cst_5 : f32 to vector<8x16xf32>
    %7 = arith.maximumf %5, %6 : vector<8x16xf32>
    %c0_6 = arith.constant 0 : index
    %c0_7 = arith.constant 0 : index
    %8 = vector.load %arg1[%c0_6, %c0_7] : memref<8x16xf32, #tpu.memory_space<vmem>>, vector<8x16xf32>
    %c0_8 = arith.constant 0 : index
    %c0_9 = arith.constant 0 : index
    %9 = vector.load %arg5[%c0_8, %c0_9] : memref<16x16xf32, #tpu.memory_space<vmem>>, vector<16x16xf32>
    %cst_10 = arith.constant dense<0.000000e+00> : vector<8x16xf32>
    %10 = tpu.matmul %8, %9, %cst_10 {dimension_numbers = #tpu.dot_dimension_numbers<[1], [0], [0], [1], [0, 0, 1, 1], [], []>} : vector<8x16xf32>, vector<16x16xf32>, vector<8x16xf32> -> vector<8x16xf32>
    %c0_11 = arith.constant 0 : index
    %c0_12 = arith.constant 0 : index
    %11 = vector.load %arg6[%c0_11, %c0_12] : memref<16x16xf32, #tpu.memory_space<vmem>>, vector<16x16xf32>
    %cst_13 = arith.constant dense<0.000000e+00> : vector<8x16xf32>
    %12 = tpu.matmul %7, %11, %cst_13 {dimension_numbers = #tpu.dot_dimension_numbers<[1], [0], [0], [1], [0, 0, 1, 1], [], []>} : vector<8x16xf32>, vector<16x16xf32>, vector<8x16xf32> -> vector<8x16xf32>
    %13 = arith.addf %10, %12 : vector<8x16xf32>
    %c0_14 = arith.constant 0 : index
    %c0_15 = arith.constant 0 : index
    %14 = vector.load %arg7[%c0_14, %c0_15] : memref<1x16xf32, #tpu.memory_space<vmem>>, vector<1x16xf32>
    %15 = vector.broadcast %14 : vector<1x16xf32> to vector<8x16xf32>
    %16 = arith.addf %13, %15 : vector<8x16xf32>
    %cst_16 = arith.constant 0.000000e+00 : f32
    %17 = vector.broadcast %cst_16 : f32 to vector<8x16xf32>
    %18 = arith.maximumf %16, %17 : vector<8x16xf32>
    %c0_17 = arith.constant 0 : index
    %c0_18 = arith.constant 0 : index
    %19 = vector.load %arg8[%c0_17, %c0_18] : memref<16x32xf32, #tpu.memory_space<vmem>>, vector<16x32xf32>
    %cst_19 = arith.constant dense<0.000000e+00> : vector<8x32xf32>
    %20 = tpu.matmul %18, %19, %cst_19 {dimension_numbers = #tpu.dot_dimension_numbers<[1], [0], [0], [1], [0, 0, 1, 1], [], []>} : vector<8x16xf32>, vector<16x32xf32>, vector<8x32xf32> -> vector<8x32xf32>
    %c0_20 = arith.constant 0 : index
    %c0_21 = arith.constant 0 : index
    %21 = vector.load %arg9[%c0_20, %c0_21] : memref<1x32xf32, #tpu.memory_space<vmem>>, vector<1x32xf32>
    %22 = vector.broadcast %21 : vector<1x32xf32> to vector<8x32xf32>
    %23 = arith.addf %20, %22 : vector<8x32xf32>
    %c0_22 = arith.constant 0 : index
    %c0_23 = arith.constant 0 : index
    %24 = vector.load %arg10[%c0_22, %c0_23] : memref<8x32xf32, #tpu.memory_space<vmem>>, vector<8x32xf32>
    tpu.vector_store %arg10[%c0_22, %c0_23], %23 {strides = array<i32>} : memref<8x32xf32, #tpu.memory_space<vmem>>, vector<8x32xf32>,
    return
  }
  func.func @transform_0(%arg0: i32) -> (i32, i32) {
    %c0_i32 = arith.constant 0 : i32
    %c0_i32_0 = arith.constant 0 : i32
    return %arg0, %c0_i32 : i32, i32
  }
  func.func @transform_1(%arg0: i32) -> (i32, i32) {
    %c0_i32 = arith.constant 0 : i32
    %c0_i32_0 = arith.constant 0 : i32
    return %arg0, %c0_i32 : i32, i32
  }
  func.func @transform_2(%arg0: i32) -> (i32, i32) {
    %c0_i32 = arith.constant 0 : i32
    %c0_i32_0 = arith.constant 0 : i32
    %c0_i32_1 = arith.constant 0 : i32
    return %c0_i32, %c0_i32_0 : i32, i32
  }
  func.func @transform_3(%arg0: i32) -> (i32, i32) {
    %c0_i32 = arith.constant 0 : i32
    %c0_i32_0 = arith.constant 0 : i32
    %c0_i32_1 = arith.constant 0 : i32
    return %c0_i32, %c0_i32_0 : i32, i32
  }
  func.func @transform_4(%arg0: i32) -> (i32, i32) {
    %c0_i32 = arith.constant 0 : i32
    %c0_i32_0 = arith.constant 0 : i32
    %c0_i32_1 = arith.constant 0 : i32
    return %c0_i32, %c0_i32_0 : i32, i32
  }
  func.func @transform_5(%arg0: i32) -> (i32, i32) {
    %c0_i32 = arith.constant 0 : i32
    %c0_i32_0 = arith.constant 0 : i32
    %c0_i32_1 = arith.constant 0 : i32
    return %c0_i32, %c0_i32_0 : i32, i32
  }
  func.func @transform_6(%arg0: i32) -> (i32, i32) {
    %c0_i32 = arith.constant 0 : i32
    %c0_i32_0 = arith.constant 0 : i32
    %c0_i32_1 = arith.constant 0 : i32
    return %c0_i32, %c0_i32_0 : i32, i32
  }
  func.func @transform_7(%arg0: i32) -> (i32, i32) {
    %c0_i32 = arith.constant 0 : i32
    %c0_i32_0 = arith.constant 0 : i32
    %c0_i32_1 = arith.constant 0 : i32
    return %c0_i32, %c0_i32_0 : i32, i32
  }
  func.func @transform_8(%arg0: i32) -> (i32, i32) {
    %c0_i32 = arith.constant 0 : i32
    %c0_i32_0 = arith.constant 0 : i32
    %c0_i32_1 = arith.constant 0 : i32
    return %c0_i32, %c0_i32_0 : i32, i32
  }
  func.func @transform_9(%arg0: i32) -> (i32, i32) {
    %c0_i32 = arith.constant 0 : i32
    %c0_i32_0 = arith.constant 0 : i32
    return %arg0, %c0_i32 : i32, i32
  }
}

</mosaic_0001>

<llo_original>
// kernel: tpu_custom_call.1
$region0: #{tpu_custom_call.1}
  #allocation0 [shape = 'u32[]', space=smem, size = 0x4, offset = 0x4, fixed_abs, tag = 'smem constant byte address 0x4 - core index']
  #allocation1 [shape = 'u32[72,128]{1,0:T(1,128)}', space=vmem, size = 0x9000, scoped, tag = 'internal scratch']
  %s0 = inlined_call_operand.vmem [shape: f32[2,16], index: 0, kind: input, shape index: {}]
  %s1 = inlined_call_operand.vmem [shape: f32[2,300], index: 1, kind: input, shape index: {}]
  %s2 = inlined_call_operand.vmem [shape: f32[300,16], index: 2, kind: input, shape index: {}]
  %s3 = inlined_call_operand.vmem [shape: f32[1,16], index: 3, kind: input, shape index: {}]
  %s4 = inlined_call_operand.vmem [shape: f32[16,16], index: 4, kind: input, shape index: {}]
  %s5 = inlined_call_operand.vmem [shape: f32[16,16], index: 5, kind: input, shape index: {}]
  %s6 = inlined_call_operand.vmem [shape: f32[1,16], index: 6, kind: input, shape index: {}]
  %s7 = inlined_call_operand.vmem [shape: f32[16,32], index: 7, kind: input, shape index: {}]
  %s8 = inlined_call_operand.vmem [shape: f32[1,32], index: 8, kind: input, shape index: {}]
  %s9 = inlined_call_operand.hbm [shape: f32[2,32], index: 9, kind: output, shape index: {}]
  %s10 = sld [smem:[#allocation0]]
  $region46: #{tpu_custom_call.1} parent=0
    _
  %s12 = ssub.s32 1, %s10
  %s13 = scalar_select 0, %s12, %s10
  $region1: #{tpu_custom_call.1} parent=0
    #allocation2 [shape = 'u8[4096]{0}', space=vmem, size = 0x1000, scoped, tag = 'output window, operand 0, single buffered']
    #allocation3 [shape = 's32[1]{0}', space=sflag, size = 0x4, scoped, tag = 'scoped memory for tpu_custom_call.1']
    %14 = vsyncpa [#allocation3], 0
    // Predicated region
    $region2: #{tpu_custom_call.1} parent=1 // pred_check
      _
    $region3: #{tpu_custom_call.1} parent=1 // pred_check_branch
      %16 = sbr.rel (0) target = $region5
    $region4: #{tpu_custom_call.1} parent=1 // pred_region
      _
    $region5: #{tpu_custom_call.1} parent=1 // pred_fallthru
      _
    // Predicated region
    $region6: #{tpu_custom_call.1} parent=1 // pred_check
      _
    $region7: #{tpu_custom_call.1} parent=1 // pred_check_branch
      %18 = sbr.rel (0) target = $region9
    $region8: #{tpu_custom_call.1} parent=1 // pred_region
      _
    $region9: #{tpu_custom_call.1} parent=1 // pred_fallthru
      _
    // Predicated region
    $region10: #{tpu_custom_call.1} parent=1 // pred_check
      _
    $region11: #{tpu_custom_call.1} parent=1 // pred_check_branch
      %20 = sbr.rel (0) target = $region13
    $region12: #{tpu_custom_call.1} parent=1 // pred_region
      _
    $region13: #{tpu_custom_call.1} parent=1 // pred_fallthru
      _
    // Predicated region
    $region14: #{tpu_custom_call.1} parent=1 // pred_check
      _
    $region15: #{tpu_custom_call.1} parent=1 // pred_check_branch
      %22 = sbr.rel (0) target = $region17
    $region16: #{tpu_custom_call.1} parent=1 // pred_region
      _
    $region17: #{tpu_custom_call.1} parent=1 // pred_fallthru
      _
    // Predicated region
    $region18: #{tpu_custom_call.1} parent=1 // pred_check
      _
    $region19: #{tpu_custom_call.1} parent=1 // pred_check_branch
      %24 = sbr.rel (0) target = $region21
    $region20: #{tpu_custom_call.1} parent=1 // pred_region
      _
    $region21: #{tpu_custom_call.1} parent=1 // pred_fallthru
      _
    // Predicated region
    $region22: #{tpu_custom_call.1} parent=1 // pred_check
      _
    $region23: #{tpu_custom_call.1} parent=1 // pred_check_branch
      %26 = sbr.rel (0) target = $region25
    $region24: #{tpu_custom_call.1} parent=1 // pred_region
      _
    $region25: #{tpu_custom_call.1} parent=1 // pred_fallthru
      _
    // Predicated region
    $region26: #{tpu_custom_call.1} parent=1 // pred_check
      _
    $region27: #{tpu_custom_call.1} parent=1 // pred_check_branch
      %28 = sbr.rel (0) target = $region29
    $region28: #{tpu_custom_call.1} parent=1 // pred_region
      _
    $region29: #{tpu_custom_call.1} parent=1 // pred_fallthru
      _
    // Predicated region
    $region30: #{tpu_custom_call.1} parent=1 // pred_check
      _
    $region31: #{tpu_custom_call.1} parent=1 // pred_check_branch
      %30 = sbr.rel (0) target = $region33
    $region32: #{tpu_custom_call.1} parent=1 // pred_region
      _
    $region33: #{tpu_custom_call.1} parent=1 // pred_fallthru
      _
    // Predicated region
    $region34: #{tpu_custom_call.1} parent=1 // pred_check
      _
    $region35: #{tpu_custom_call.1} parent=1 // pred_check_branch
      %32 = sbr.rel (0) target = $region37
    $region36: #{tpu_custom_call.1} parent=1 // pred_region
      _
    $region37: #{tpu_custom_call.1} parent=1 // pred_fallthru
      _
    %v33 = vld [vmem:[%s1] sm:$0x3f]
    %v34 = vld [vmem:[%s1 + $0x6] sm:$0x3f]
    %v35 = vld [vmem:[%s1 + $0xc] sm:$0x3f]
    %v36 = vld [vmem:[%s1 + $0x12] sm:$0x3f]
    %v37 = vld [vmem:[%s2] sm:$0xff]
    %v38 = vld [vmem:[%s2 + $0x8] sm:$0xff]
    %v39 = vld [vmem:[%s2 + $0x10] sm:$0xff]
    %v40 = vld [vmem:[%s2 + $0x18] sm:$0xff]
    %v41 = vld [vmem:[%s2 + $0x20] sm:$0xff]
    %v42 = vld [vmem:[%s2 + $0x28] sm:$0xff]
    %v43 = vld [vmem:[%s2 + $0x30] sm:$0xff]
    %v44 = vld [vmem:[%s2 + $0x38] sm:$0xff]
    %v45 = vld [vmem:[%s2 + $0x40] sm:$0xff]
    %v46 = vld [vmem:[%s2 + $0x48] sm:$0xff]
    %v47 = vld [vmem:[%s2 + $0x50] sm:$0xff]
    %v48 = vld [vmem:[%s2 + $0x58] sm:$0xff]
    %v49 = vld [vmem:[%s2 + $0x60] sm:$0xff]
    %v50 = vld [vmem:[%s2 + $0x68] sm:$0xff]
    %v51 = vld [vmem:[%s2 + $0x70] sm:$0xff]
    %v52 = vld [vmem:[%s2 + $0x78] sm:$0xff]
    %v53 = vld [vmem:[%s2 + $0x80] sm:$0xff]
    %v54 = vld [vmem:[%s2 + $0x88] sm:$0xff]
    %v55 = vld [vmem:[%s2 + $0x90] sm:$0xff]
    %v56 = vld [vmem:[%s2 + $0x98] sm:$0xff]
    %v57 = vld [vmem:[%s2 + $0xa0] sm:$0xff]
    %v58 = vld [vmem:[%s2 + $0xa8] sm:$0xff]
    %v59 = vld [vmem:[%s2 + $0xb0] sm:$0xff]
    %v60 = vld [vmem:[%s2 + $0xb8] sm:$0xff]
    %v61 = vld [vmem:[%s2 + $0xc0] sm:$0xff]
    %v62 = vld [vmem:[%s2 + $0xc8] sm:$0xff]
    %v63 = vld [vmem:[%s2 + $0xd0] sm:$0xff]
    %v64 = vld [vmem:[%s2 + $0xd8] sm:$0xff]
    %v65 = vld [vmem:[%s2 + $0xe0] sm:$0xff]
    %v66 = vld [vmem:[%s2 + $0xe8] sm:$0xff]
    %v67 = vld [vmem:[%s2 + $0xf0] sm:$0xff]
    %v68 = vld [vmem:[%s2 + $0xf8] sm:$0xff]
    %v69 = vld [vmem:[%s2 + $0x100] sm:$0xff]
    %v70 = vld [vmem:[%s2 + $0x108] sm:$0xff]
    %v71 = vld [vmem:[%s2 + $0x110] sm:$0xff]
    %v72 = vld [vmem:[%s2 + $0x118] sm:$0xff]
    %v73 = vld [vmem:[%s2 + $0x120] sm:$0xff]
    %v74 = vld [vmem:[%s2 + $0x128] sm:$0xf]
    %v75 = vld [vmem:[%s3] sm:$0x1]
    %v77 = vperm.slane %v75, 0
    %83 = vst [vmem:[#allocation1] ss:$4 sm:$0xff] %v33
    %s84 = scalar_lea.vmem [#allocation1], 1
    %85 = vst [vmem:[%s84] ss:$4 sm:$0xff] %v34
    %s86 = scalar_lea.vmem [#allocation1], 2
    %87 = vst [vmem:[%s86] ss:$4 sm:$0xff] %v35
    %s88 = scalar_lea.vmem [#allocation1], 3
    %89 = vst [vmem:[%s88] ss:$4 sm:$0xff] %v36
    %v90 = vld.sshfl [vmem:[#allocation1] sm:$0xff pattern:$0x73625140]
    %v91 = vld.sshfl [vmem:[#allocation1 + $0x8] sm:$0xff pattern:$0x73625140]
    %v92 = vld.sshfl [vmem:[#allocation1 + $0x10] sm:$0xff pattern:$0x73625140]
    %vm95 = vcmask 359424
    %v96 = vsel %vm95, %v92, 0
    %vm98 = vcmask 1043456
    %v100 = vsel %vm98, %v74, 0
    %102 = vmatpush.msra.mxu0 %v52
    %103 = vmatpush.msra.mxu0 %v51
    %104 = vmatpush.msra.mxu0 %v50
    %105 = vmatpush.msra.mxu0 %v49
    %106 = vmatpush.msra.mxu0 %v48
    %107 = vmatpush.msra.mxu0 %v47
    %108 = vmatpush.msra.mxu0 %v46
    %109 = vmatpush.msra.mxu0 %v45
    %110 = vmatpush.msra.mxu0 %v44
    %111 = vmatpush.msra.mxu0 %v43
    %112 = vmatpush.msra.mxu0 %v42
    %113 = vmatpush.msra.mxu0 %v41
    %114 = vmatpush.msra.mxu0 %v40
    %115 = vmatpush.msra.mxu0 %v39
    %116 = vmatpush.msra.mxu0 %v38
    %117 = vmatpush.msra.mxu0 %v37
    %118 = vmatmul.f32.gmra.mxu0 %v90
    %v119 = vpop.f32.mrf.mxu0
    %v120 = vadd.f32 %v77, %v119
    %121 = vdwg.mxu0
    %122 = vmatpush.msra.mxu0 %v68
    %123 = vmatpush.msra.mxu0 %v67
    %124 = vmatpush.msra.mxu0 %v66
    %125 = vmatpush.msra.mxu0 %v65
    %126 = vmatpush.msra.mxu0 %v64
    %127 = vmatpush.msra.mxu0 %v63
    %128 = vmatpush.msra.mxu0 %v62
    %129 = vmatpush.msra.mxu0 %v61
    %130 = vmatpush.msra.mxu0 %v60
    %131 = vmatpush.msra.mxu0 %v59
    %132 = vmatpush.msra.mxu0 %v58
    %133 = vmatpush.msra.mxu0 %v57
    %134 = vmatpush.msra.mxu0 %v56
    %135 = vmatpush.msra.mxu0 %v55
    %136 = vmatpush.msra.mxu0 %v54
    %137 = vmatpush.msra.mxu0 %v53
    %138 = vmatmul.f32.gmra.mxu0 %v91
    %v139 = vpop.f32.mrf.mxu0
    %v140 = vadd.f32 %v120, %v139
    %141 = vdwg.mxu0
    %142 = vmatpush.msra.mxu0 0.0
    %143 = vmatpush.msra.mxu0 0.0
    %144 = vmatpush.msra.mxu0 0.0
    %145 = vmatpush.msra.mxu0 0.0
    %146 = vmatpush.msra.mxu0 0.0
    %147 = vmatpush.msra.mxu0 0.0
    %148 = vmatpush.msra.mxu0 0.0
    %149 = vmatpush.msra.mxu0 0.0
    %150 = vmatpush.msra.mxu0 0.0
    %151 = vmatpush.msra.mxu0 0.0
    %152 = vmatpush.msra.mxu0 %v100
    %153 = vmatpush.msra.mxu0 %v73
    %154 = vmatpush.msra.mxu0 %v72
    %155 = vmatpush.msra.mxu0 %v71
    %156 = vmatpush.msra.mxu0 %v70
    %157 = vmatpush.msra.mxu0 %v69
    %158 = vmatmul.f32.gmra.mxu0 %v96
    %v159 = vpop.f32.mrf.mxu0
    %v160 = vadd.f32 %v140, %v159
    %161 = vdwg.mxu0
    %v162 = vmax.f32 %v160, 0.0
    %v163 = vld [vmem:[%s0] sm:$0xff]
    %v164 = vld [vmem:[%s4] sm:$0xff]
    %v165 = vld [vmem:[%s4 + $0x8] sm:$0xff]
    %v166 = vld [vmem:[%s5] sm:$0xff]
    %v167 = vld [vmem:[%s5 + $0x8] sm:$0xff]
    %vm168 = vcmask 130048
    %v170 = vsel %vm168, %v162, 0
    %172 = vmatpush.msra.mxu0 0.0
    %173 = vmatpush.msra.mxu0 0.0
    %174 = vmatpush.msra.mxu0 0.0
    %175 = vmatpush.msra.mxu0 0.0
    %176 = vmatpush.msra.mxu0 0.0
    %177 = vmatpush.msra.mxu0 0.0
    %178 = vmatpush.msra.mxu0 0.0
    %179 = vmatpush.msra.mxu0 0.0
    %180 = vmatpush.msra.mxu0 0.0
    %181 = vmatpush.msra.mxu0 0.0
    %182 = vmatpush.msra.mxu0 0.0
    %183 = vmatpush.msra.mxu0 0.0
    %184 = vmatpush.msra.mxu0 0.0
    %185 = vmatpush.msra.mxu0 0.0
    %186 = vmatpush.msra.mxu0 %v167
    %187 = vmatpush.msra.mxu0 %v166
    %188 = vmatmul.f32.gmra.mxu0 %v170
    %v189 = vpop.f32.mrf.mxu0
    %v190 = vadd.f32 0.0, %v189
    %191 = vdwg.mxu0
    %v193 = vsel %vm168, %v163, 0
    %195 = vmatpush.msra.mxu0 0.0
    %196 = vmatpush.msra.mxu0 0.0
    %197 = vmatpush.msra.mxu0 0.0
    %198 = vmatpush.msra.mxu0 0.0
    %199 = vmatpush.msra.mxu0 0.0
    %200 = vmatpush.msra.mxu0 0.0
    %201 = vmatpush.msra.mxu0 0.0
    %202 = vmatpush.msra.mxu0 0.0
    %203 = vmatpush.msra.mxu0 0.0
    %204 = vmatpush.msra.mxu0 0.0
    %205 = vmatpush.msra.mxu0 0.0
    %206 = vmatpush.msra.mxu0 0.0
    %207 = vmatpush.msra.mxu0 0.0
    %208 = vmatpush.msra.mxu0 0.0
    %209 = vmatpush.msra.mxu0 %v165
    %210 = vmatpush.msra.mxu0 %v164
    %211 = vmatmul.f32.gmra.mxu0 %v193
    %v212 = vpop.f32.mrf.mxu0
    %v213 = vadd.f32 %v190, %v212
    %214 = vdwg.mxu0
    %v215 = vld [vmem:[%s6] sm:$0x1]
    %v217 = vperm.slane %v215, 0
    %v219 = vadd.f32 %v213, %v217
    %v220 = vmax.f32 %v219, 0.0
    %v221 = vld [vmem:[%s7] sm:$0xff]
    %v222 = vld [vmem:[%s7 + $0x8] sm:$0xff]
    %v223 = vld [vmem:[%s8] sm:$0x1]
    %v225 = vperm.slane %v223, 0
    %v228 = vsel %vm168, %v220, 0
    %230 = vmatpush.msra.mxu0 0.0
    %231 = vmatpush.msra.mxu0 0.0
    %232 = vmatpush.msra.mxu0 0.0
    %233 = vmatpush.msra.mxu0 0.0
    %234 = vmatpush.msra.mxu0 0.0
    %235 = vmatpush.msra.mxu0 0.0
    %236 = vmatpush.msra.mxu0 0.0
    %237 = vmatpush.msra.mxu0 0.0
    %238 = vmatpush.msra.mxu0 0.0
    %239 = vmatpush.msra.mxu0 0.0
    %240 = vmatpush.msra.mxu0 0.0
    %241 = vmatpush.msra.mxu0 0.0
    %242 = vmatpush.msra.mxu0 0.0
    %243 = vmatpush.msra.mxu0 0.0
    %244 = vmatpush.msra.mxu0 %v222
    %245 = vmatpush.msra.mxu0 %v221
    %246 = vmatmul.f32.gmra.mxu0 %v228
    %v247 = vpop.f32.mrf.mxu0
    %v248 = vadd.f32 %v225, %v247
    %249 = vdwg.mxu0
    %vm250 = vcmask 261120
    %251 = vst.msk [vmem:[#allocation2] sm:$0xff] %vm250, %v248
    // Predicated region
    $region38: #{tpu_custom_call.1} parent=1 // pred_check
      _
    $region39: #{tpu_custom_call.1} parent=1 // pred_check_branch
      %253 = sbr.rel (0) target = $region41
    $region40: #{tpu_custom_call.1} parent=1 // pred_region
      %255 = vsyncadd [#allocation3], 96
      %s256 = sshll.u32 [#allocation2], 4
      %s257 = int_to_ptr.vmem [resolvable:$true] %s256
      %s258 = sshll.u32 %s9, 4
      %s259 = int_to_ptr.hbm [resolvable:$true] %s258
      %264 = dma.vmem_to_hbm [thread:$0]  %s257, 32, %s259, [#allocation3], 32, 32, 2
    $region41: #{tpu_custom_call.1} parent=1 // pred_fallthru
      _
    // Predicated region
    $region42: #{tpu_custom_call.1} parent=1 // pred_check
      _
    $region43: #{tpu_custom_call.1} parent=1 // pred_check_branch
      %266 = sbr.rel (0) target = $region45
    $region44: #{tpu_custom_call.1} parent=1 // pred_region
      %268 = dma.done [#allocation3], 128
    $region45: #{tpu_custom_call.1} parent=1 // pred_fallthru
      _
    %269 = vsyncpa [#allocation3], 1

</llo_original>
